<compile_context>
chip_gen: v7x
topology: tpu7x:2x2x1
jax: 0.10.0
libtpu: 0.0.40
codegen_flags: <defaults>
</compile_context>

<pallas_src>
import functools
import math

import jax
import jax.numpy as jnp
from jax import lax
from jax.experimental import pallas as pl
from jax.experimental.pallas import tpu as pltpu


GROUP = 8        # independent row copies per gather-loop iteration (VMEM path)
DMA_WINDOW = 8   # in-flight row DMAs (HBM-gather path)


def _layer_norm_f32(x, gamma, beta, eps):
    # Single pass over x: mean and E[x^2] from the same read; rsqrt -> EUP.
    mean = jnp.mean(x, axis=-1, keepdims=True)
    mean_sq = jnp.mean(x * x, axis=-1, keepdims=True)
    var = jnp.maximum(mean_sq - mean * mean, 0.0)
    inv = lax.rsqrt(var + eps)
    return (x - mean) * inv * gamma + beta


# --------------------------------------------------------------------------
# Path A: embedding table resident in VMEM (small vocab).
# --------------------------------------------------------------------------
def _vmem_table_kernel(ids_ref, table_ref, gamma_ref, beta_ref, out_ref, *,
                       eps, token_tile, vocab_size):
    # ids_ref:    (Np,)      int32  SMEM (whole array, resident)
    # table_ref:  (V, H)     native VMEM (whole table, single-buffered)
    # gamma/beta: (1, H)     f32    VMEM
    # out_ref:    (tile, H)  f32    output tile (doubles as gather staging)
    base = pl.program_id(0) * token_tile
    n_groups = token_tile // GROUP

    def gather_group(g, carry):
        t0 = pl.multiple_of(g * GROUP, GROUP)
        for u in range(GROUP):  # GROUP independent load->store chains per iter
            tok = ids_ref[base + t0 + u]
            tok = jnp.clip(tok, 0, vocab_size - 1)  # no OOB check on VMEM refs
            out_ref[pl.ds(t0 + u, 1), :] = (
                table_ref[pl.ds(tok, 1), :].astype(out_ref.dtype))
        return carry

    lax.fori_loop(0, n_groups, gather_group, 0, unroll=False)

    emb = out_ref[...]
    out_ref[...] = _layer_norm_f32(emb, gamma_ref[...], beta_ref[...], eps)
    # Dropout with hidden_dropout_prob=0 is the identity.


# --------------------------------------------------------------------------
# Path B: embedding table stays in HBM; rows gathered via windowed DMAs.
# --------------------------------------------------------------------------
def _hbm_table_kernel(ids_ref, table_hbm, gamma_ref, beta_ref, out_ref,
                      rows_ref, dma_sems, *, eps, token_tile, vocab_size,
                      window):
    # ids_ref:    (Np,)      int32   SMEM
    # table_hbm:  (V, H)     native  HBM (pl.ANY)
    # rows_ref:   (tile, H)  native  VMEM scratch (gathered rows)
    # dma_sems:   (window,)  DMA semaphores
    base = pl.program_id(0) * token_tile

    def issue(t, slot):
        tok = jnp.clip(ids_ref[base + t], 0, vocab_size - 1)
        pltpu.make_async_copy(table_hbm.at[pl.ds(tok, 1), :],
                              rows_ref.at[pl.ds(t, 1), :],
                              dma_sems.at[slot]).start()

    # Prime the DMA window (window is a small static int).
    for t in range(window):
        issue(t, t)

    def step(t, carry):
        slot = lax.rem(t, window)
        # Wait for row t's DMA (same byte count / same semaphore slot).
        pltpu.make_async_copy(table_hbm.at[pl.ds(0, 1), :],
                              rows_ref.at[pl.ds(0, 1), :],
                              dma_sems.at[slot]).wait()

        @pl.when(t + window < token_tile)
        def _():
            issue(t + window, slot)

        return carry

    lax.fori_loop(0, token_tile, step, 0, unroll=False)

    emb = rows_ref[...].astype(jnp.float32)
    out_ref[...] = _layer_norm_f32(emb, gamma_ref[...], beta_ref[...], eps)


# --------------------------------------------------------------------------
# Wrapper
# --------------------------------------------------------------------------
def _round_up(x, m):
    return ((x + m - 1) // m) * m


def _vmem_capacity_bytes():
    try:
        info = pltpu.get_tpu_info()
        cap = getattr(info, "vmem_capacity_bytes", None)
        if cap:
            return int(cap)
    except Exception:
        pass
    return 64 << 20  # conservative default: v7x per-TensorCore VMEM


def transtab_word_embedding(input_ids, table, gamma, beta, *,
                            layer_norm_eps=1e-5, token_tile=512,
                            padding_idx=0, force_hbm_gather=False):
    """input_ids: (B, S) int; table: (V, H) native dtype; gamma/beta: (H,)."""
    B, S = input_ids.shape
    V, H = table.shape
    N = B * S

    assert token_tile % GROUP == 0, "token_tile must be a multiple of 8"
    # Shrink the tile for tiny inputs so padded rows stay cheap.
    tile = min(token_tile, _round_up(N, GROUP))
    n_tiles = pl.cdiv(N, tile)
    Np = n_tiles * tile

    ids_flat = input_ids.reshape(N).astype(jnp.int32)
    if Np != N:
        ids_flat = jnp.pad(ids_flat, (0, Np - N), constant_values=padding_idx)

    gamma2 = gamma.reshape(1, H).astype(jnp.float32)
    beta2 = beta.reshape(1, H).astype(jnp.float32)

    # Generation-aware VMEM budget (v7x: 64 MiB per TensorCore).
    vmem_cap = _vmem_capacity_bytes()
    vmem_budget = max(vmem_cap - (8 << 20), 16 << 20)

    table_bytes = V * H * table.dtype.itemsize
    out_tile_bytes = tile * H * 4          # f32 output block (double-buffered)
    rows_bytes = tile * H * table.dtype.itemsize
    param_bytes = 2 * H * 4

    vmem_path_need = table_bytes + 2 * out_tile_bytes + param_bytes + (2 << 20)
    use_vmem_table = (not force_hbm_gather) and vmem_path_need <= vmem_budget

    smem_ids_spec = pl.BlockSpec(memory_space=pltpu.MemorySpace.SMEM)
    vmem_whole_spec = pl.BlockSpec(memory_space=pltpu.MemorySpace.VMEM)
    out_spec = pl.BlockSpec((tile, H), lambda i: (i, 0))

    if use_vmem_table:
        # TODO(synk): on v7x (2 TCs, "parallel" grid) a VMEM-resident table is
        # replicated into each core's VMEM; VMEM_SHARED would halve that.
        kernel = functools.partial(_vmem_table_kernel, eps=layer_norm_eps,
                                   token_tile=tile, vocab_size=V)
        grid_spec = pltpu.PrefetchScalarGridSpec(
            num_scalar_prefetch=0,
            grid=(n_tiles,),
            in_specs=[smem_ids_spec, vmem_whole_spec, vmem_whole_spec,
                      vmem_whole_spec],
            out_specs=out_spec,
            scratch_shapes=[])
        vmem_need = vmem_path_need
    else:
        window = min(DMA_WINDOW, tile)
        kernel = functools.partial(_hbm_table_kernel, eps=layer_norm_eps,
                                   token_tile=tile, vocab_size=V,
                                   window=window)
        grid_spec = pltpu.PrefetchScalarGridSpec(
            num_scalar_prefetch=0,
            grid=(n_tiles,),
            in_specs=[smem_ids_spec,
                      pl.BlockSpec(memory_space=pl.ANY),   # table stays in HBM
                      vmem_whole_spec, vmem_whole_spec],
            out_specs=out_spec,
            scratch_shapes=[pltpu.VMEM((tile, H), table.dtype),
                            pltpu.SemaphoreType.DMA((window,))])
        vmem_need = 2 * out_tile_bytes + rows_bytes + param_bytes + (2 << 20)

    vmem_limit = int(min(max(vmem_need, 16 << 20), vmem_budget))

    out_flat = pl.pallas_call(
        kernel,
        out_shape=jax.ShapeDtypeStruct((Np, H), jnp.float32),
        grid_spec=grid_spec,
        compiler_params=pltpu.CompilerParams(
            dimension_semantics=("parallel",),
            vmem_limit_bytes=vmem_limit),
    )(ids_flat, table, gamma2, beta2)

    return out_flat[:N].reshape(B, S, H)


def _reference(input_ids, table, gamma, beta, eps=1e-5):
    emb = jnp.take(table.astype(jnp.float32), input_ids, axis=0)
    mean = jnp.mean(emb, axis=-1, keepdims=True)
    var = jnp.mean((emb - mean) ** 2, axis=-1, keepdims=True)
    return (emb - mean) * lax.rsqrt(var + eps) * gamma + beta


if __name__ == "__main__":
    # Small shapes consistent with the module's forward.
    vocab_size = 64
    hidden_dim = 32
    batch, seq = 2, 8

    key = jax.random.PRNGKey(0)
    k_tab, k_ids = jax.random.split(key)

    # Deterministic kaiming_normal_ init of the (vocab, hidden) table:
    # std = sqrt(2 / fan_in), fan_in = hidden_dim (matches PyTorch).
    # kaiming_normal_ overwrites the padding_idx row too, so no zeroing.
    table = (jax.random.normal(k_tab, (vocab_size, hidden_dim), jnp.float32)
             * math.sqrt(2.0 / hidden_dim))
    gamma = jnp.ones((hidden_dim,), jnp.float32)
    beta = jnp.zeros((hidden_dim,), jnp.float32)

    input_ids = jax.random.randint(k_ids, (batch, seq), 0, vocab_size,
                                   dtype=jnp.int32)

    ref = _reference(input_ids, table, gamma, beta)

    # Path A: VMEM-resident table (auto-selected for this small vocab).
    out_vmem = jax.block_until_ready(
        transtab_word_embedding(input_ids, table, gamma, beta))
    assert out_vmem.shape == (batch, seq, hidden_dim)
    assert jnp.allclose(out_vmem, ref, atol=1e-5, rtol=1e-5), \
        "VMEM-table path mismatch vs reference"

    # Path B: HBM DMA-gather (what large-vocab tables use, esp. on v7x).
    out_hbm = jax.block_until_ready(
        transtab_word_embedding(input_ids, table, gamma, beta,
                                force_hbm_gather=True))
    assert jnp.allclose(out_hbm, ref, atol=1e-5, rtol=1e-5), \
        "HBM-gather path mismatch vs reference"

    print("KERNEL_OK")
</pallas_src>

<mosaic_0001>
module attributes {stable_mosaic.version = 11 : i64} {
  func.func @_vmem_table_kernel(%arg0: i32, %arg1: memref<16xi32, #tpu.memory_space<smem>>, %arg2: memref<64x32xf32, #tpu.memory_space<vmem>>, %arg3: memref<1x32xf32, #tpu.memory_space<vmem>>, %arg4: memref<1x32xf32, #tpu.memory_space<vmem>>, %arg5: memref<16x32xf32, #tpu.memory_space<vmem>>) attributes {dimension_semantics = [#tpu.dimension_semantics<parallel>], iteration_bounds = array<i64: 1>, scalar_prefetch = 0 : i64, scratch_operands = 0 : i64, tpu.core_type = #tpu.core_type<tc>, window_params = [{transform_indices = @transform_0, window_bounds = array<i64: 16>}, {pipeline_mode = #tpu.pipeline_mode<synchronous>, transform_indices = @transform_1, window_bounds = array<i64: 64, 32>}, {pipeline_mode = #tpu.pipeline_mode<synchronous>, transform_indices = @transform_2, window_bounds = array<i64: 1, 32>}, {pipeline_mode = #tpu.pipeline_mode<synchronous>, transform_indices = @transform_3, window_bounds = array<i64: 1, 32>}, {transform_indices = @transform_4, window_bounds = array<i64: 16, 32>}]} {
    %c16_i32 = arith.constant 16 : i32
    %0 = arith.muli %arg0, %c16_i32 : i32
    %c0_i32 = arith.constant 0 : i32
    %c2_i32 = arith.constant 2 : i32
    %1 = arith.addi %c0_i32, %c2_i32 : i32
    %c1_i32 = arith.constant 1 : i32
    scf.for %arg6 = %c0_i32 to %1 step %c1_i32  : i32 {
      %c8_i32 = arith.constant 8 : i32
      %30 = arith.muli %arg6, %c8_i32 : i32
      %31 = tpu.assume_multiple %30, 8 : i32
      %32 = arith.addi %0, %31 : i32
      %c0_i32_13 = arith.constant 0 : i32
      %33 = arith.addi %32, %c0_i32_13 : i32
      %34 = arith.index_cast %33 : i32 to index
      %35 = memref.load %arg1[%34] : memref<16xi32, #tpu.memory_space<smem>>
      %c0_i32_14 = arith.constant 0 : i32
      %c63_i32 = arith.constant 63 : i32
      %36 = arith.maxsi %c0_i32_14, %35 : i32
      %37 = arith.minsi %c63_i32, %36 : i32
      %38 = arith.index_cast %37 : i32 to index
      %c0_15 = arith.constant 0 : index
      %39 = vector.load %arg2[%38, %c0_15] : memref<64x32xf32, #tpu.memory_space<vmem>>, vector<1x32xf32>
      %c0_i32_16 = arith.constant 0 : i32
      %40 = arith.addi %31, %c0_i32_16 : i32
      %41 = arith.index_cast %40 : i32 to index
      %c0_17 = arith.constant 0 : index
      %42 = vector.load %arg5[%41, %c0_17] : memref<16x32xf32, #tpu.memory_space<vmem>>, vector<1x32xf32>
      tpu.vector_store %arg5[%41, %c0_17], %39 {strides = array<i32>} : memref<16x32xf32, #tpu.memory_space<vmem>>, vector<1x32xf32>,
      %43 = arith.addi %0, %31 : i32
      %c1_i32_18 = arith.constant 1 : i32
      %44 = arith.addi %43, %c1_i32_18 : i32
      %45 = arith.index_cast %44 : i32 to index
      %46 = memref.load %arg1[%45] : memref<16xi32, #tpu.memory_space<smem>>
      %c0_i32_19 = arith.constant 0 : i32
      %c63_i32_20 = arith.constant 63 : i32
      %47 = arith.maxsi %c0_i32_19, %46 : i32
      %48 = arith.minsi %c63_i32_20, %47 : i32
      %49 = arith.index_cast %48 : i32 to index
      %c0_21 = arith.constant 0 : index
      %50 = vector.load %arg2[%49, %c0_21] : memref<64x32xf32, #tpu.memory_space<vmem>>, vector<1x32xf32>
      %c1_i32_22 = arith.constant 1 : i32
      %51 = arith.addi %31, %c1_i32_22 : i32
      %52 = arith.index_cast %51 : i32 to index
      %c0_23 = arith.constant 0 : index
      %53 = vector.load %arg5[%52, %c0_23] : memref<16x32xf32, #tpu.memory_space<vmem>>, vector<1x32xf32>
      tpu.vector_store %arg5[%52, %c0_23], %50 {strides = array<i32>} : memref<16x32xf32, #tpu.memory_space<vmem>>, vector<1x32xf32>,
      %54 = arith.addi %0, %31 : i32
      %c2_i32_24 = arith.constant 2 : i32
      %55 = arith.addi %54, %c2_i32_24 : i32
      %56 = arith.index_cast %55 : i32 to index
      %57 = memref.load %arg1[%56] : memref<16xi32, #tpu.memory_space<smem>>
      %c0_i32_25 = arith.constant 0 : i32
      %c63_i32_26 = arith.constant 63 : i32
      %58 = arith.maxsi %c0_i32_25, %57 : i32
      %59 = arith.minsi %c63_i32_26, %58 : i32
      %60 = arith.index_cast %59 : i32 to index
      %c0_27 = arith.constant 0 : index
      %61 = vector.load %arg2[%60, %c0_27] : memref<64x32xf32, #tpu.memory_space<vmem>>, vector<1x32xf32>
      %c2_i32_28 = arith.constant 2 : i32
      %62 = arith.addi %31, %c2_i32_28 : i32
      %63 = arith.index_cast %62 : i32 to index
      %c0_29 = arith.constant 0 : index
      %64 = vector.load %arg5[%63, %c0_29] : memref<16x32xf32, #tpu.memory_space<vmem>>, vector<1x32xf32>
      tpu.vector_store %arg5[%63, %c0_29], %61 {strides = array<i32>} : memref<16x32xf32, #tpu.memory_space<vmem>>, vector<1x32xf32>,
      %65 = arith.addi %0, %31 : i32
      %c3_i32 = arith.constant 3 : i32
      %66 = arith.addi %65, %c3_i32 : i32
      %67 = arith.index_cast %66 : i32 to index
      %68 = memref.load %arg1[%67] : memref<16xi32, #tpu.memory_space<smem>>
      %c0_i32_30 = arith.constant 0 : i32
      %c63_i32_31 = arith.constant 63 : i32
      %69 = arith.maxsi %c0_i32_30, %68 : i32
      %70 = arith.minsi %c63_i32_31, %69 : i32
      %71 = arith.index_cast %70 : i32 to index
      %c0_32 = arith.constant 0 : index
      %72 = vector.load %arg2[%71, %c0_32] : memref<64x32xf32, #tpu.memory_space<vmem>>, vector<1x32xf32>
      %c3_i32_33 = arith.constant 3 : i32
      %73 = arith.addi %31, %c3_i32_33 : i32
      %74 = arith.index_cast %73 : i32 to index
      %c0_34 = arith.constant 0 : index
      %75 = vector.load %arg5[%74, %c0_34] : memref<16x32xf32, #tpu.memory_space<vmem>>, vector<1x32xf32>
      tpu.vector_store %arg5[%74, %c0_34], %72 {strides = array<i32>} : memref<16x32xf32, #tpu.memory_space<vmem>>, vector<1x32xf32>,
      %76 = arith.addi %0, %31 : i32
      %c4_i32 = arith.constant 4 : i32
      %77 = arith.addi %76, %c4_i32 : i32
      %78 = arith.index_cast %77 : i32 to index
      %79 = memref.load %arg1[%78] : memref<16xi32, #tpu.memory_space<smem>>
      %c0_i32_35 = arith.constant 0 : i32
      %c63_i32_36 = arith.constant 63 : i32
      %80 = arith.maxsi %c0_i32_35, %79 : i32
      %81 = arith.minsi %c63_i32_36, %80 : i32
      %82 = arith.index_cast %81 : i32 to index
      %c0_37 = arith.constant 0 : index
      %83 = vector.load %arg2[%82, %c0_37] : memref<64x32xf32, #tpu.memory_space<vmem>>, vector<1x32xf32>
      %c4_i32_38 = arith.constant 4 : i32
      %84 = arith.addi %31, %c4_i32_38 : i32
      %85 = arith.index_cast %84 : i32 to index
      %c0_39 = arith.constant 0 : index
      %86 = vector.load %arg5[%85, %c0_39] : memref<16x32xf32, #tpu.memory_space<vmem>>, vector<1x32xf32>
      tpu.vector_store %arg5[%85, %c0_39], %83 {strides = array<i32>} : memref<16x32xf32, #tpu.memory_space<vmem>>, vector<1x32xf32>,
      %87 = arith.addi %0, %31 : i32
      %c5_i32 = arith.constant 5 : i32
      %88 = arith.addi %87, %c5_i32 : i32
      %89 = arith.index_cast %88 : i32 to index
      %90 = memref.load %arg1[%89] : memref<16xi32, #tpu.memory_space<smem>>
      %c0_i32_40 = arith.constant 0 : i32
      %c63_i32_41 = arith.constant 63 : i32
      %91 = arith.maxsi %c0_i32_40, %90 : i32
      %92 = arith.minsi %c63_i32_41, %91 : i32
      %93 = arith.index_cast %92 : i32 to index
      %c0_42 = arith.constant 0 : index
      %94 = vector.load %arg2[%93, %c0_42] : memref<64x32xf32, #tpu.memory_space<vmem>>, vector<1x32xf32>
      %c5_i32_43 = arith.constant 5 : i32
      %95 = arith.addi %31, %c5_i32_43 : i32
      %96 = arith.index_cast %95 : i32 to index
      %c0_44 = arith.constant 0 : index
      %97 = vector.load %arg5[%96, %c0_44] : memref<16x32xf32, #tpu.memory_space<vmem>>, vector<1x32xf32>
      tpu.vector_store %arg5[%96, %c0_44], %94 {strides = array<i32>} : memref<16x32xf32, #tpu.memory_space<vmem>>, vector<1x32xf32>,
      %98 = arith.addi %0, %31 : i32
      %c6_i32 = arith.constant 6 : i32
      %99 = arith.addi %98, %c6_i32 : i32
      %100 = arith.index_cast %99 : i32 to index
      %101 = memref.load %arg1[%100] : memref<16xi32, #tpu.memory_space<smem>>
      %c0_i32_45 = arith.constant 0 : i32
      %c63_i32_46 = arith.constant 63 : i32
      %102 = arith.maxsi %c0_i32_45, %101 : i32
      %103 = arith.minsi %c63_i32_46, %102 : i32
      %104 = arith.index_cast %103 : i32 to index
      %c0_47 = arith.constant 0 : index
      %105 = vector.load %arg2[%104, %c0_47] : memref<64x32xf32, #tpu.memory_space<vmem>>, vector<1x32xf32>
      %c6_i32_48 = arith.constant 6 : i32
      %106 = arith.addi %31, %c6_i32_48 : i32
      %107 = arith.index_cast %106 : i32 to index
      %c0_49 = arith.constant 0 : index
      %108 = vector.load %arg5[%107, %c0_49] : memref<16x32xf32, #tpu.memory_space<vmem>>, vector<1x32xf32>
      tpu.vector_store %arg5[%107, %c0_49], %105 {strides = array<i32>} : memref<16x32xf32, #tpu.memory_space<vmem>>, vector<1x32xf32>,
      %109 = arith.addi %0, %31 : i32
      %c7_i32 = arith.constant 7 : i32
      %110 = arith.addi %109, %c7_i32 : i32
      %111 = arith.index_cast %110 : i32 to index
      %112 = memref.load %arg1[%111] : memref<16xi32, #tpu.memory_space<smem>>
      %c0_i32_50 = arith.constant 0 : i32
      %c63_i32_51 = arith.constant 63 : i32
      %113 = arith.maxsi %c0_i32_50, %112 : i32
      %114 = arith.minsi %c63_i32_51, %113 : i32
      %115 = arith.index_cast %114 : i32 to index
      %c0_52 = arith.constant 0 : index
      %116 = vector.load %arg2[%115, %c0_52] : memref<64x32xf32, #tpu.memory_space<vmem>>, vector<1x32xf32>
      %c7_i32_53 = arith.constant 7 : i32
      %117 = arith.addi %31, %c7_i32_53 : i32
      %118 = arith.index_cast %117 : i32 to index
      %c0_54 = arith.constant 0 : index
      %119 = vector.load %arg5[%118, %c0_54] : memref<16x32xf32, #tpu.memory_space<vmem>>, vector<1x32xf32>
      tpu.vector_store %arg5[%118, %c0_54], %116 {strides = array<i32>} : memref<16x32xf32, #tpu.memory_space<vmem>>, vector<1x32xf32>,
    }
    %c2_i32_0 = arith.constant 2 : i32
    %c0 = arith.constant 0 : index
    %c0_1 = arith.constant 0 : index
    %2 = vector.load %arg5[%c0, %c0_1] : memref<16x32xf32, #tpu.memory_space<vmem>>, vector<16x32xf32>
    %c0_2 = arith.constant 0 : index
    %c0_3 = arith.constant 0 : index
    %3 = vector.load %arg3[%c0_2, %c0_3] : memref<1x32xf32, #tpu.memory_space<vmem>>, vector<1x32xf32>
    %c0_4 = arith.constant 0 : index
    %c0_5 = arith.constant 0 : index
    %4 = vector.load %arg4[%c0_4, %c0_5] : memref<1x32xf32, #tpu.memory_space<vmem>>, vector<1x32xf32>
    %cst = arith.constant dense<0.000000e+00> : vector<16xf32>
    %5 = vector.multi_reduction <add>, %2, %cst [1] : vector<16x32xf32> to vector<16xf32>
    %6 = vector.shape_cast %5 : vector<16xf32> to vector<16x1xf32>
    %cst_6 = arith.constant 3.200000e+01 : f32
    %7 = vector.broadcast %cst_6 : f32 to vector<16x1xf32>
    %8 = arith.divf %6, %7 : vector<16x1xf32>
    %9 = arith.mulf %2, %2 : vector<16x32xf32>
    %cst_7 = arith.constant dense<0.000000e+00> : vector<16xf32>
    %10 = vector.multi_reduction <add>, %9, %cst_7 [1] : vector<16x32xf32> to vector<16xf32>
    %11 = vector.shape_cast %10 : vector<16xf32> to vector<16x1xf32>
    %cst_8 = arith.constant 3.200000e+01 : f32
    %12 = vector.broadcast %cst_8 : f32 to vector<16x1xf32>
    %13 = arith.divf %11, %12 : vector<16x1xf32>
    %14 = arith.mulf %8, %8 : vector<16x1xf32>
    %15 = arith.subf %13, %14 : vector<16x1xf32>
    %cst_9 = arith.constant 0.000000e+00 : f32
    %16 = vector.broadcast %cst_9 : f32 to vector<16x1xf32>
    %17 = arith.maximumf %15, %16 : vector<16x1xf32>
    %cst_10 = arith.constant 9.99999974E-6 : f32
    %18 = vector.broadcast %cst_10 : f32 to vector<16x1xf32>
    %19 = arith.addf %17, %18 : vector<16x1xf32>
    %20 = math.rsqrt %19 : vector<16x1xf32>
    %21 = vector.broadcast %8 : vector<16x1xf32> to vector<16x32xf32>
    %22 = arith.subf %2, %21 : vector<16x32xf32>
    %23 = vector.broadcast %20 : vector<16x1xf32> to vector<16x32xf32>
    %24 = arith.mulf %22, %23 : vector<16x32xf32>
    %25 = vector.broadcast %3 : vector<1x32xf32> to vector<16x32xf32>
    %26 = arith.mulf %24, %25 : vector<16x32xf32>
    %27 = vector.broadcast %4 : vector<1x32xf32> to vector<16x32xf32>
    %28 = arith.addf %26, %27 : vector<16x32xf32>
    %c0_11 = arith.constant 0 : index
    %c0_12 = arith.constant 0 : index
    %29 = vector.load %arg5[%c0_11, %c0_12] : memref<16x32xf32, #tpu.memory_space<vmem>>, vector<16x32xf32>
    tpu.vector_store %arg5[%c0_11, %c0_12], %28 {strides = array<i32>} : memref<16x32xf32, #tpu.memory_space<vmem>>, vector<16x32xf32>,
    return
  }
  func.func @transform_0(%arg0: i32) -> i32 {
    %c0_i32 = arith.constant 0 : i32
    %c0_i32_0 = arith.constant 0 : i32
    return %c0_i32 : i32
  }
  func.func @transform_1(%arg0: i32) -> (i32, i32) {
    %c0_i32 = arith.constant 0 : i32
    %c0_i32_0 = arith.constant 0 : i32
    %c0_i32_1 = arith.constant 0 : i32
    return %c0_i32, %c0_i32_0 : i32, i32
  }
  func.func @transform_2(%arg0: i32) -> (i32, i32) {
    %c0_i32 = arith.constant 0 : i32
    %c0_i32_0 = arith.constant 0 : i32
    %c0_i32_1 = arith.constant 0 : i32
    return %c0_i32, %c0_i32_0 : i32, i32
  }
  func.func @transform_3(%arg0: i32) -> (i32, i32) {
    %c0_i32 = arith.constant 0 : i32
    %c0_i32_0 = arith.constant 0 : i32
    %c0_i32_1 = arith.constant 0 : i32
    return %c0_i32, %c0_i32_0 : i32, i32
  }
  func.func @transform_4(%arg0: i32) -> (i32, i32) {
    %c0_i32 = arith.constant 0 : i32
    %c0_i32_0 = arith.constant 0 : i32
    return %arg0, %c0_i32 : i32, i32
  }
}

</mosaic_0001>

<llo_original>
// kernel: tpu_custom_call.1
$region0: #{tpu_custom_call.1}
  #allocation0 [shape = 'u32[]', space=smem, size = 0x4, offset = 0x4, fixed_abs, tag = 'smem constant byte address 0x4 - core index']
  #allocation1 [shape = 'u32[144,128]{1,0:T(1,128)}', space=vmem, size = 0x12000, scoped, tag = 'internal scratch']
  %s0 = inlined_call_operand.vmem [shape: s32[16], index: 0, kind: input, shape index: {}]
  %s1 = inlined_call_operand.vmem [shape: f32[64,32], index: 1, kind: input, shape index: {}]
  %s2 = inlined_call_operand.vmem [shape: f32[1,32], index: 2, kind: input, shape index: {}]
  %s3 = inlined_call_operand.vmem [shape: f32[1,32], index: 3, kind: input, shape index: {}]
  %s4 = inlined_call_operand.hbm [shape: f32[16,32], index: 4, kind: output, shape index: {}]
  %s5 = sld [smem:[#allocation0]]
  $region37: #{tpu_custom_call.1} parent=0
    _
  %s7 = ssub.s32 1, %s5
  %s8 = scalar_select 0, %s7, %s5
  $region1: #{tpu_custom_call.1} parent=0
    #allocation2 [shape = 'u8[512]{0}', space=smem, size = 0x200, scoped, tag = 'input window, operand 0, single buffered']
    #allocation3 [shape = 's32[1]{0}', space=sflag, size = 0x4, scoped, tag = 'scoped memory for tpu_custom_call.1']
    #allocation4 [shape = 's32[1]{0}', space=sflag, size = 0x4, scoped, tag = 'scoped memory for tpu_custom_call.1']
    #allocation5 [shape = 'u8[8192]{0}', space=vmem, size = 0x2000, scoped, tag = 'output window, operand 0, single buffered']
    %9 = vsyncpa [#allocation4], 0
    %10 = vsyncpa [#allocation3], 0
    // Predicated region
    $region2: #{tpu_custom_call.1} parent=1 // pred_check
      _
    $region3: #{tpu_custom_call.1} parent=1 // pred_check_branch
      %12 = sbr.rel (0) target = $region5
    $region4: #{tpu_custom_call.1} parent=1 // pred_region
      %s14 = ssub.s32 16, 16
      %15 = vsyncadd [#allocation4], %s14
      %s17 = sshll.u32 %s0, 4
      %s18 = int_to_ptr.vmem [resolvable:$true] %s17
      %20 = dma.vmem_to_smem %s18, 16, [#allocation2], [#allocation4]
    $region5: #{tpu_custom_call.1} parent=1 // pred_fallthru
      _
    // Predicated region
    $region6: #{tpu_custom_call.1} parent=1 // pred_check
      _
    $region7: #{tpu_custom_call.1} parent=1 // pred_check_branch
      %22 = sbr.rel (0) target = $region9
    $region8: #{tpu_custom_call.1} parent=1 // pred_region
      _
    $region9: #{tpu_custom_call.1} parent=1 // pred_fallthru
      _
    // Predicated region
    $region10: #{tpu_custom_call.1} parent=1 // pred_check
      _
    $region11: #{tpu_custom_call.1} parent=1 // pred_check_branch
      %24 = sbr.rel (0) target = $region13
    $region12: #{tpu_custom_call.1} parent=1 // pred_region
      _
    $region13: #{tpu_custom_call.1} parent=1 // pred_fallthru
      _
    // Predicated region
    $region14: #{tpu_custom_call.1} parent=1 // pred_check
      _
    $region15: #{tpu_custom_call.1} parent=1 // pred_check_branch
      %26 = sbr.rel (0) target = $region17
    $region16: #{tpu_custom_call.1} parent=1 // pred_region
      _
    $region17: #{tpu_custom_call.1} parent=1 // pred_fallthru
      _
    // Predicated region
    $region18: #{tpu_custom_call.1} parent=1 // pred_check
      _
    $region19: #{tpu_custom_call.1} parent=1 // pred_check_branch
      %28 = sbr.rel (0) target = $region21
    $region20: #{tpu_custom_call.1} parent=1 // pred_region
      %29 = dma.done [#allocation4], 16
    $region21: #{tpu_custom_call.1} parent=1 // pred_fallthru
      _
    %30 = sfence
    %s31 = smul.u32 0, 16
    loop: start=0, step=1, limit=2
    $region22: #{tpu_custom_call.1} parent=1 // loop_pre_header
      _
    $region23: #{tpu_custom_call.1} parent=1 // loop_header
      %s33 = sphi 0, %s37
      %p34 = scmp.ge.s32.totalorder %s33, 2
    $region24: #{tpu_custom_call.1} parent=1 // loop_header_branch
      %36 = sbr.rel (%p34) target = $region28
    $region25: #{tpu_custom_call.1} parent=1 // loop_body
      %s38 = smul.u32 %s33, 8
      %s39 = sadd.s32 %s31, %s38
      %s40 = sld [smem:[#allocation2 + %s39]]
      %p41 = scmp.gt.s32.totalorder %s40, 0
      %s42 = scalar_select %p41, %s40, 0
      %p43 = scmp.lt.s32.totalorder %s42, 63
      %s44 = scalar_select %p43, %s42, 63
      %s45 = scalar_lea.vmem %s1, %s44
      %v46 = vld [vmem:[%s45] sm:$0x1]
      %s47 = scalar_lea.vmem [#allocation5], %s38
      %vm48 = vcmask 253952
      %49 = vst.msk [vmem:[%s47] sm:$0x1] %vm48, %v46
      %s50 = sadd.s32 %s39, 1
      %s51 = sld [smem:[#allocation2 + %s50]]
      %p52 = scmp.gt.s32.totalorder %s51, 0
      %s53 = scalar_select %p52, %s51, 0
      %p54 = scmp.lt.s32.totalorder %s53, 63
      %s55 = scalar_select %p54, %s53, 63
      %s56 = scalar_lea.vmem %s1, %s55
      %v57 = vld [vmem:[%s56] sm:$0x1]
      %s58 = sadd.s32 %s38, 1
      %s59 = scalar_lea.vmem [#allocation5], %s58
      %60 = vst.msk [vmem:[%s59] sm:$0x1] %vm48, %v57
      %s61 = sadd.s32 %s39, 2
      %s62 = sld [smem:[#allocation2 + %s61]]
      %p63 = scmp.gt.s32.totalorder %s62, 0
      %s64 = scalar_select %p63, %s62, 0
      %p65 = scmp.lt.s32.totalorder %s64, 63
      %s66 = scalar_select %p65, %s64, 63
      %s67 = scalar_lea.vmem %s1, %s66
      %v68 = vld [vmem:[%s67] sm:$0x1]
      %s69 = sadd.s32 %s38, 2
      %s70 = scalar_lea.vmem [#allocation5], %s69
      %71 = vst.msk [vmem:[%s70] sm:$0x1] %vm48, %v68
      %s72 = sadd.s32 %s39, 3
      %s73 = sld [smem:[#allocation2 + %s72]]
      %p74 = scmp.gt.s32.totalorder %s73, 0
      %s75 = scalar_select %p74, %s73, 0
      %p76 = scmp.lt.s32.totalorder %s75, 63
      %s77 = scalar_select %p76, %s75, 63
      %s78 = scalar_lea.vmem %s1, %s77
      %v79 = vld [vmem:[%s78] sm:$0x1]
      %s80 = sadd.s32 %s38, 3
      %s81 = scalar_lea.vmem [#allocation5], %s80
      %82 = vst.msk [vmem:[%s81] sm:$0x1] %vm48, %v79
      %s83 = sadd.s32 %s39, 4
      %s84 = sld [smem:[#allocation2 + %s83]]
      %p85 = scmp.gt.s32.totalorder %s84, 0
      %s86 = scalar_select %p85, %s84, 0
      %p87 = scmp.lt.s32.totalorder %s86, 63
      %s88 = scalar_select %p87, %s86, 63
      %s89 = scalar_lea.vmem %s1, %s88
      %v90 = vld [vmem:[%s89] sm:$0x1]
      %s91 = sadd.s32 %s38, 4
      %s92 = scalar_lea.vmem [#allocation5], %s91
      %93 = vst.msk [vmem:[%s92] sm:$0x1] %vm48, %v90
      %s94 = sadd.s32 %s39, 5
      %s95 = sld [smem:[#allocation2 + %s94]]
      %p96 = scmp.gt.s32.totalorder %s95, 0
      %s97 = scalar_select %p96, %s95, 0
      %p98 = scmp.lt.s32.totalorder %s97, 63
      %s99 = scalar_select %p98, %s97, 63
      %s100 = scalar_lea.vmem %s1, %s99
      %v101 = vld [vmem:[%s100] sm:$0x1]
      %s102 = sadd.s32 %s38, 5
      %s103 = scalar_lea.vmem [#allocation5], %s102
      %104 = vst.msk [vmem:[%s103] sm:$0x1] %vm48, %v101
      %s105 = sadd.s32 %s39, 6
      %s106 = sld [smem:[#allocation2 + %s105]]
      %p107 = scmp.gt.s32.totalorder %s106, 0
      %s108 = scalar_select %p107, %s106, 0
      %p109 = scmp.lt.s32.totalorder %s108, 63
      %s110 = scalar_select %p109, %s108, 63
      %s111 = scalar_lea.vmem %s1, %s110
      %v112 = vld [vmem:[%s111] sm:$0x1]
      %s113 = sadd.s32 %s38, 6
      %s114 = scalar_lea.vmem [#allocation5], %s113
      %115 = vst.msk [vmem:[%s114] sm:$0x1] %vm48, %v112
      %s116 = sadd.s32 %s39, 7
      %s117 = sld [smem:[#allocation2 + %s116]]
      %p118 = scmp.gt.s32.totalorder %s117, 0
      %s119 = scalar_select %p118, %s117, 0
      %p120 = scmp.lt.s32.totalorder %s119, 63
      %s121 = scalar_select %p120, %s119, 63
      %s122 = scalar_lea.vmem %s1, %s121
      %v123 = vld [vmem:[%s122] sm:$0x1]
      %s124 = sadd.s32 %s38, 7
      %s125 = scalar_lea.vmem [#allocation5], %s124
      %126 = vst.msk [vmem:[%s125] sm:$0x1] %vm48, %v123
    $region26: #{tpu_custom_call.1} parent=1 // loop_footer
      %s37 = sadd.s32 1, %s33
    $region27: #{tpu_custom_call.1} parent=1 // loop_footer_branch
      %32 = sbr.rel target = $region23
    $region28: #{tpu_custom_call.1} parent=1 // loop_exit
      _
    %v127 = vld [vmem:[#allocation5] sm:$0xff]
    %v128 = vld [vmem:[#allocation5 + $0x8] sm:$0xff]
    %v129 = vld [vmem:[%s2] sm:$0x1]
    %v130 = vld [vmem:[%s3] sm:$0x1]
    %vm131 = vcmask 261120
    %v132 = vsel %vm131, %v127, 0.0
    %133 = vadd.xlane.f32.xlu0 %v132
    %v134 = vpop.xlane.xlu0 %133
    %v135 = vsel %vm131, %v128, 0.0
    %136 = vadd.xlane.f32.xlu0 %v135
    %v137 = vpop.xlane.xlu0 %136
    %v138 = vrcp.pop 32.0
    %v139 = vmul.f32 %v134, %v138
    %v140 = vmul.f32 %v137, %v138
    %v141 = vmul.f32 %v127, %v127
    %v142 = vmul.f32 %v128, %v128
    %v143 = vsel %vm131, %v141, 0.0
    %144 = vadd.xlane.f32.xlu0 %v143
    %v145 = vpop.xlane.xlu0 %144
    %v146 = vsel %vm131, %v142, 0.0
    %147 = vadd.xlane.f32.xlu0 %v146
    %v148 = vpop.xlane.xlu0 %147
    %v149 = vmul.f32 %v145, %v138
    %v150 = vmul.f32 %v148, %v138
    %v151 = vmul.f32 %v139, %v139
    %v152 = vmul.f32 %v140, %v140
    %v153 = vsub.f32 %v149, %v151
    %v154 = vsub.f32 %v150, %v152
    %v155 = vmax.f32 %v153, 0.0
    %v156 = vmax.f32 %v154, 0.0
    %v157 = vadd.f32 %v155, 1e-05
    %v158 = vadd.f32 %v156, 1e-05
    %v159 = vrsqrt.pop %v157
    %v160 = vrsqrt.pop %v158
    %v161 = vsub.f32 %v127, %v139
    %v162 = vsub.f32 %v128, %v140
    %v163 = vmul.f32 %v161, %v159
    %v164 = vmul.f32 %v162, %v160
    %v166 = vlaneseq
    %v167 = vshrl.u32 %v166, 7
    %v168 = vsub.s32 0, %v167
    %v169 = vrot.slane %v129, %v168
    %v171 = vmul.f32 %v163, %v169
    %v172 = vmul.f32 %v164, %v169
    %v174 = vlaneseq
    %v175 = vshrl.u32 %v174, 7
    %v176 = vsub.s32 0, %v175
    %v177 = vrot.slane %v130, %v176
    %v179 = vadd.f32 %v171, %v177
    %v180 = vadd.f32 %v172, %v177
    %181 = vst.msk [vmem:[#allocation5] sm:$0xff] %vm131, %v179
    %182 = vst.msk [vmem:[#allocation5 + $0x8] sm:$0xff] %vm131, %v180
    // Predicated region
    $region29: #{tpu_custom_call.1} parent=1 // pred_check
      _
    $region30: #{tpu_custom_call.1} parent=1 // pred_check_branch
      %184 = sbr.rel (0) target = $region32
    $region31: #{tpu_custom_call.1} parent=1 // pred_region
      %s186 = ssub.s32 256, 256
      %187 = vsyncadd [#allocation3], %s186
      %s188 = sshll.u32 [#allocation5], 4
      %s189 = int_to_ptr.vmem [resolvable:$true] %s188
      %194 = dma.vmem_to_hbm [thread:$0]  %s189, 256, %s4, [#allocation3], 128, 128, 8
    $region32: #{tpu_custom_call.1} parent=1 // pred_fallthru
      _
    // Predicated region
    $region33: #{tpu_custom_call.1} parent=1 // pred_check
      _
    $region34: #{tpu_custom_call.1} parent=1 // pred_check_branch
      %196 = sbr.rel (0) target = $region36
    $region35: #{tpu_custom_call.1} parent=1 // pred_region
      %197 = dma.done [#allocation3], 256
    $region36: #{tpu_custom_call.1} parent=1 // pred_fallthru
      _
    %198 = vsyncpa [#allocation3], 1
    %199 = vsyncpa [#allocation4], 1

</llo_original>
